<compile_context>
chip_gen: v6e
topology: v6e:2x2x1
jax: 0.10.0
libtpu: 0.0.40
codegen_flags: <defaults>
</compile_context>

<pallas_src>
import functools

import jax
import jax.numpy as jnp
from jax.experimental import pallas as pl
from jax.experimental.pallas import tpu as pltpu

LN_EPS = 1e-5


def _round_up(x, m):
    return ((x + m - 1) // m) * m


def _make_prenorm_linear_kernel(d):
    """Fused LayerNorm + Linear kernel over the true feature dim d."""
    inv_d = 1.0 / float(d)

    def kernel(x_ref, w_ref, b_ref, o_ref):
        # x_ref: (TM, D) rows; w_ref: (D, D) = gamma-folded W^T; b_ref: (1, D) f32.
        x = x_ref[...].astype(jnp.float32)

        # LayerNorm statistics in f32 over the full (un-padded) feature axis;
        # biased variance, eps inside rsqrt, matching torch.nn.LayerNorm.
        mean = jnp.sum(x, axis=-1, keepdims=True) * inv_d
        xc = x - mean
        var = jnp.sum(xc * xc, axis=-1, keepdims=True) * inv_d
        xn = xc * jax.lax.rsqrt(var + LN_EPS)

        # Affine already folded into w/b.  Feed the MXU in the weight's native
        # dtype (bf16 stays bf16); accumulate in f32.
        y = jnp.dot(xn.astype(w_ref.dtype), w_ref[...],
                    preferred_element_type=jnp.float32)
        y = y + b_ref[...]
        o_ref[...] = y.astype(o_ref.dtype)

    return kernel


@functools.partial(jax.jit,
                   static_argnames=("tm", "single_buffer_weight", "mxu_dtype"))
def prenorm_linear(x, gamma, beta, w_t, b, *, tm=512,
                   single_buffer_weight=True, mxu_dtype=None):
    """PreNorm(dim, Linear(dim, dim)) forward.

    x: (B, N, D); gamma/beta/b: (D,); w_t: (D, D) already transposed to (in, out).
    mxu_dtype: optional dtype (e.g. jnp.bfloat16) to cast the folded weight to.
    """
    B, N, D = x.shape
    M = B * N
    x_dtype = x.dtype
    w_dtype = jnp.dtype(w_t.dtype) if mxu_dtype is None else jnp.dtype(mxu_dtype)

    # ---- fold the LayerNorm affine into the linear layer (one-time O(D^2)) ----
    gamma32 = gamma.astype(jnp.float32)
    beta32 = beta.astype(jnp.float32)
    w32 = w_t.astype(jnp.float32)
    w_eff = (gamma32[:, None] * w32).astype(w_dtype)          # (D, D)
    b_eff = (beta32 @ w32 + b.astype(jnp.float32)).reshape(1, D)  # (1, D) f32

    # ---- row tiling: cdiv grid, no wrapper-side padding or output slicing ----
    tm_eff = min(tm, _round_up(M, 8))                         # clamp for tiny inputs
    grid_m = pl.cdiv(M, tm_eff)
    x2 = x.reshape(M, D)                                      # view, no HBM pass

    # ---- VMEM budget (includes the kernel's f32 intermediates) ----
    bpe_x = jnp.dtype(x_dtype).itemsize
    bpe_w = jnp.dtype(w_dtype).itemsize
    w_bufs = 1 if single_buffer_weight else 2
    vmem_need = (2 * tm_eff * D * bpe_x                    # pipelined x tiles
                 + 2 * tm_eff * D * bpe_x                  # pipelined out tiles
                 + w_bufs * (D * D * bpe_w + D * 4)        # weight + f32 bias
                 + 4 * tm_eff * D * 4)                     # f32 x/xc/xn/acc temporaries
    try:
        phys_vmem = int(pltpu.get_tpu_info().vmem_capacity_bytes)
    except Exception:
        phys_vmem = 128 * 1024 * 1024
    vmem_limit = None
    if vmem_need > 16 * 1024 * 1024:                       # v5e default scoped limit
        vmem_limit = int(min(max(vmem_need * 5 // 4, 32 * 1024 * 1024),
                             int(phys_vmem * 0.8)))

    cost = pl.CostEstimate(
        flops=2 * M * D * D,
        transcendentals=M,                                 # one rsqrt per row
        bytes_accessed=2 * M * D * bpe_x + D * D * bpe_w + D * 4,
    )

    kernel = _make_prenorm_linear_kernel(D)

    # Single-buffer the grid-invariant weight / bias blocks (constant index_map,
    # never re-fetched), so they only hold one VMEM copy.
    invariant_kwargs = (
        dict(pipeline_mode=pl.Buffered(1)) if single_buffer_weight else {}
    )
    in_specs = [
        pl.BlockSpec((tm_eff, D), lambda i: (i, 0)),                    # x rows
        pl.BlockSpec((D, D), lambda i: (0, 0), **invariant_kwargs),     # folded W^T
        pl.BlockSpec((1, D), lambda i: (0, 0), **invariant_kwargs),     # folded bias
    ]

    out = pl.pallas_call(
        kernel,
        out_shape=jax.ShapeDtypeStruct((M, D), x_dtype),
        grid_spec=pltpu.PrefetchScalarGridSpec(
            num_scalar_prefetch=0,
            grid=(grid_m,),
            in_specs=in_specs,
            out_specs=pl.BlockSpec((tm_eff, D), lambda i: (i, 0)),
        ),
        compiler_params=pltpu.CompilerParams(
            dimension_semantics=("parallel",),
            vmem_limit_bytes=vmem_limit,
        ),
        cost_estimate=cost,
    )(x2, w_eff, b_eff)

    return out.reshape(B, N, D)


def reference(x, gamma, beta, w_t, b):
    xf = x.astype(jnp.float32)
    mean = jnp.mean(xf, axis=-1, keepdims=True)
    var = jnp.mean((xf - mean) ** 2, axis=-1, keepdims=True)
    xn = (xf - mean) * jax.lax.rsqrt(var + LN_EPS)
    xn = xn * gamma.astype(jnp.float32) + beta.astype(jnp.float32)
    return (xn @ w_t.astype(jnp.float32) + b.astype(jnp.float32)).astype(x.dtype)


if __name__ == "__main__":
    B, N, D = 2, 8, 32
    key = jax.random.PRNGKey(0)
    kx, kg, kb, kw, kbi = jax.random.split(key, 5)

    x = jax.random.normal(kx, (B, N, D), dtype=jnp.float32)

    # Deterministic parameters (LayerNorm affine + Linear(dim, dim))
    gamma = 1.0 + 0.01 * jax.random.normal(kg, (D,), dtype=jnp.float32)
    beta = 0.01 * jax.random.normal(kb, (D,), dtype=jnp.float32)
    w = jax.random.normal(kw, (D, D), dtype=jnp.float32) / jnp.sqrt(D)
    w_t = w.T  # kernel consumes (in, out)
    b = 0.01 * jax.random.normal(kbi, (D,), dtype=jnp.float32)

    try:
        y = jax.block_until_ready(prenorm_linear(x, gamma, beta, w_t, b))
    except Exception:
        # Safety net: if this jax build rejects pipeline_mode on grid BlockSpecs,
        # fall back to default (double-buffered) invariant blocks.
        y = jax.block_until_ready(
            prenorm_linear(x, gamma, beta, w_t, b, single_buffer_weight=False))

    y_ref = reference(x, gamma, beta, w_t, b)
    assert y.shape == y_ref.shape, "shape mismatch vs reference"
    assert jnp.allclose(y, y_ref, atol=1e-4, rtol=1e-4), "mismatch vs reference"

    print("KERNEL_OK")
</pallas_src>

<mosaic_0001>
module attributes {stable_mosaic.version = 11 : i64} {
  func.func @kernel(%arg0: i32, %arg1: memref<16x32xf32, #tpu.memory_space<vmem>>, %arg2: memref<32x32xf32, #tpu.memory_space<vmem>>, %arg3: memref<1x32xf32, #tpu.memory_space<vmem>>, %arg4: memref<16x32xf32, #tpu.memory_space<vmem>>) attributes {dimension_semantics = [#tpu.dimension_semantics<parallel>], iteration_bounds = array<i64: 1>, scalar_prefetch = 0 : i64, scratch_operands = 0 : i64, tpu.core_type = #tpu.core_type<tc>, window_params = [{transform_indices = @transform_0, window_bounds = array<i64: 16, 32>}, {pipeline_mode = #tpu.pipeline_mode<synchronous>, transform_indices = @transform_1, window_bounds = array<i64: 32, 32>}, {pipeline_mode = #tpu.pipeline_mode<synchronous>, transform_indices = @transform_2, window_bounds = array<i64: 1, 32>}, {transform_indices = @transform_3, window_bounds = array<i64: 16, 32>}]} {
    %c0 = arith.constant 0 : index
    %c0_0 = arith.constant 0 : index
    %0 = vector.load %arg1[%c0, %c0_0] : memref<16x32xf32, #tpu.memory_space<vmem>>, vector<16x32xf32>
    %cst = arith.constant dense<0.000000e+00> : vector<16xf32>
    %1 = vector.multi_reduction <add>, %0, %cst [1] : vector<16x32xf32> to vector<16xf32>
    %2 = vector.shape_cast %1 : vector<16xf32> to vector<16x1xf32>
    %cst_1 = arith.constant 3.125000e-02 : f32
    %3 = vector.broadcast %cst_1 : f32 to vector<16x1xf32>
    %4 = arith.mulf %2, %3 : vector<16x1xf32>
    %5 = vector.broadcast %4 : vector<16x1xf32> to vector<16x32xf32>
    %6 = arith.subf %0, %5 : vector<16x32xf32>
    %7 = arith.mulf %6, %6 : vector<16x32xf32>
    %cst_2 = arith.constant dense<0.000000e+00> : vector<16xf32>
    %8 = vector.multi_reduction <add>, %7, %cst_2 [1] : vector<16x32xf32> to vector<16xf32>
    %9 = vector.shape_cast %8 : vector<16xf32> to vector<16x1xf32>
    %cst_3 = arith.constant 3.125000e-02 : f32
    %10 = vector.broadcast %cst_3 : f32 to vector<16x1xf32>
    %11 = arith.mulf %9, %10 : vector<16x1xf32>
    %cst_4 = arith.constant 9.99999974E-6 : f32
    %12 = vector.broadcast %cst_4 : f32 to vector<16x1xf32>
    %13 = arith.addf %11, %12 : vector<16x1xf32>
    %14 = math.rsqrt %13 : vector<16x1xf32>
    %15 = vector.broadcast %14 : vector<16x1xf32> to vector<16x32xf32>
    %16 = arith.mulf %6, %15 : vector<16x32xf32>
    %c0_5 = arith.constant 0 : index
    %c0_6 = arith.constant 0 : index
    %17 = vector.load %arg2[%c0_5, %c0_6] : memref<32x32xf32, #tpu.memory_space<vmem>>, vector<32x32xf32>
    %cst_7 = arith.constant dense<0.000000e+00> : vector<16x32xf32>
    %18 = tpu.matmul %16, %17, %cst_7 {dimension_numbers = #tpu.dot_dimension_numbers<[1], [0], [0], [1], [0, 0, 1, 1], [], []>} : vector<16x32xf32>, vector<32x32xf32>, vector<16x32xf32> -> vector<16x32xf32>
    %c0_8 = arith.constant 0 : index
    %c0_9 = arith.constant 0 : index
    %19 = vector.load %arg3[%c0_8, %c0_9] : memref<1x32xf32, #tpu.memory_space<vmem>>, vector<1x32xf32>
    %20 = vector.broadcast %19 : vector<1x32xf32> to vector<16x32xf32>
    %21 = arith.addf %18, %20 : vector<16x32xf32>
    %c0_10 = arith.constant 0 : index
    %c0_11 = arith.constant 0 : index
    %22 = vector.load %arg4[%c0_10, %c0_11] : memref<16x32xf32, #tpu.memory_space<vmem>>, vector<16x32xf32>
    tpu.vector_store %arg4[%c0_10, %c0_11], %21 {strides = array<i32>} : memref<16x32xf32, #tpu.memory_space<vmem>>, vector<16x32xf32>,
    return
  }
  func.func @transform_0(%arg0: i32) -> (i32, i32) {
    %c0_i32 = arith.constant 0 : i32
    %c0_i32_0 = arith.constant 0 : i32
    return %arg0, %c0_i32 : i32, i32
  }
  func.func @transform_1(%arg0: i32) -> (i32, i32) {
    %c0_i32 = arith.constant 0 : i32
    %c0_i32_0 = arith.constant 0 : i32
    %c0_i32_1 = arith.constant 0 : i32
    return %c0_i32, %c0_i32_0 : i32, i32
  }
  func.func @transform_2(%arg0: i32) -> (i32, i32) {
    %c0_i32 = arith.constant 0 : i32
    %c0_i32_0 = arith.constant 0 : i32
    %c0_i32_1 = arith.constant 0 : i32
    return %c0_i32, %c0_i32_0 : i32, i32
  }
  func.func @transform_3(%arg0: i32) -> (i32, i32) {
    %c0_i32 = arith.constant 0 : i32
    %c0_i32_0 = arith.constant 0 : i32
    return %arg0, %c0_i32 : i32, i32
  }
}

module attributes {stable_mosaic.version = 11 : i64} {
  func.func @kernel(%arg0: i32, %arg1: memref<16x32xf32, #tpu.memory_space<vmem>>, %arg2: memref<32x32xf32, #tpu.memory_space<vmem>>, %arg3: memref<1x32xf32, #tpu.memory_space<vmem>>, %arg4: memref<16x32xf32, #tpu.memory_space<vmem>>) attributes {dimension_semantics = [#tpu.dimension_semantics<parallel>], iteration_bounds = array<i64: 1>, scalar_prefetch = 0 : i64, scratch_operands = 0 : i64, tpu.core_type = #tpu.core_type<tc>, window_params = [{transform_indices = @transform_0, window_bounds = array<i64: 16, 32>}, {pipeline_mode = #tpu.pipeline_mode<synchronous>, transform_indices = @transform_1, window_bounds = array<i64: 32, 32>}, {pipeline_mode = #tpu.pipeline_mode<synchronous>, transform_indices = @transform_2, window_bounds = array<i64: 1, 32>}, {transform_indices = @transform_3, window_bounds = array<i64: 16, 32>}]} {
    %c0 = arith.constant 0 : index
    %c0_0 = arith.constant 0 : index
    %0 = vector.load %arg1[%c0, %c0_0] : memref<16x32xf32, #tpu.memory_space<vmem>>, vector<16x32xf32>
    %cst = arith.constant dense<0.000000e+00> : vector<16xf32>
    %1 = vector.multi_reduction <add>, %0, %cst [1] : vector<16x32xf32> to vector<16xf32>
    %2 = vector.shape_cast %1 : vector<16xf32> to vector<16x1xf32>
    %cst_1 = arith.constant 3.125000e-02 : f32
    %3 = vector.broadcast %cst_1 : f32 to vector<16x1xf32>
    %4 = arith.mulf %2, %3 : vector<16x1xf32>
    %5 = vector.broadcast %4 : vector<16x1xf32> to vector<16x32xf32>
    %6 = arith.subf %0, %5 : vector<16x32xf32>
    %7 = arith.mulf %6, %6 : vector<16x32xf32>
    %cst_2 = arith.constant dense<0.000000e+00> : vector<16xf32>
    %8 = vector.multi_reduction <add>, %7, %cst_2 [1] : vector<16x32xf32> to vector<16xf32>
    %9 = vector.shape_cast %8 : vector<16xf32> to vector<16x1xf32>
    %cst_3 = arith.constant 3.125000e-02 : f32
    %10 = vector.broadcast %cst_3 : f32 to vector<16x1xf32>
    %11 = arith.mulf %9, %10 : vector<16x1xf32>
    %cst_4 = arith.constant 9.99999974E-6 : f32
    %12 = vector.broadcast %cst_4 : f32 to vector<16x1xf32>
    %13 = arith.addf %11, %12 : vector<16x1xf32>
    %14 = math.rsqrt %13 : vector<16x1xf32>
    %15 = vector.broadcast %14 : vector<16x1xf32> to vector<16x32xf32>
    %16 = arith.mulf %6, %15 : vector<16x32xf32>
    %c0_5 = arith.constant 0 : index
    %c0_6 = arith.constant 0 : index
    %17 = vector.load %arg2[%c0_5, %c0_6] : memref<32x32xf32, #tpu.memory_space<vmem>>, vector<32x32xf32>
    %cst_7 = arith.constant dense<0.000000e+00> : vector<16x32xf32>
    %18 = tpu.matmul %16, %17, %cst_7 {dimension_numbers = #tpu.dot_dimension_numbers<[1], [0], [0], [1], [0, 0, 1, 1], [], []>} : vector<16x32xf32>, vector<32x32xf32>, vector<16x32xf32> -> vector<16x32xf32>
    %c0_8 = arith.constant 0 : index
    %c0_9 = arith.constant 0 : index
    %19 = vector.load %arg3[%c0_8, %c0_9] : memref<1x32xf32, #tpu.memory_space<vmem>>, vector<1x32xf32>
    %20 = vector.broadcast %19 : vector<1x32xf32> to vector<16x32xf32>
    %21 = arith.addf %18, %20 : vector<16x32xf32>
    %c0_10 = arith.constant 0 : index
    %c0_11 = arith.constant 0 : index
    %22 = vector.load %arg4[%c0_10, %c0_11] : memref<16x32xf32, #tpu.memory_space<vmem>>, vector<16x32xf32>
    tpu.vector_store %arg4[%c0_10, %c0_11], %21 {strides = array<i32>} : memref<16x32xf32, #tpu.memory_space<vmem>>, vector<16x32xf32>,
    return
  }
  func.func @transform_0(%arg0: i32) -> (i32, i32) {
    %c0_i32 = arith.constant 0 : i32
    %c0_i32_0 = arith.constant 0 : i32
    return %arg0, %c0_i32 : i32, i32
  }
  func.func @transform_1(%arg0: i32) -> (i32, i32) {
    %c0_i32 = arith.constant 0 : i32
    %c0_i32_0 = arith.constant 0 : i32
    %c0_i32_1 = arith.constant 0 : i32
    return %c0_i32, %c0_i32_0 : i32, i32
  }
  func.func @transform_2(%arg0: i32) -> (i32, i32) {
    %c0_i32 = arith.constant 0 : i32
    %c0_i32_0 = arith.constant 0 : i32
    %c0_i32_1 = arith.constant 0 : i32
    return %c0_i32, %c0_i32_0 : i32, i32
  }
  func.func @transform_3(%arg0: i32) -> (i32, i32) {
    %c0_i32 = arith.constant 0 : i32
    %c0_i32_0 = arith.constant 0 : i32
    return %arg0, %c0_i32 : i32, i32
  }
}

</mosaic_0001>

<llo_original>
// kernel: prenorm_linear.1
$region0: #{prenorm_linear.1}
  #allocation0 [shape = 'u32[]', space=smem, size = 0x4, offset = 0x4, fixed_abs, tag = 'smem constant byte address 0x4 - core index']
  #allocation1 [shape = 'u32[144,128]{1,0:T(1,128)}', space=vmem, size = 0x12000, scoped, tag = 'internal scratch']
  %s0 = inlined_call_operand.vmem [shape: f32[16,32], index: 0, kind: input, shape index: {}]
  %s1 = inlined_call_operand.vmem [shape: f32[32,32], index: 1, kind: input, shape index: {}]
  %s2 = inlined_call_operand.vmem [shape: f32[1,32], index: 2, kind: input, shape index: {}]
  %s3 = inlined_call_operand.hbm [shape: f32[16,32], index: 3, kind: output, shape index: {}]
  %s4 = sld [smem:[#allocation0]]
  $region22: #{prenorm_linear.1} parent=0
    _
  %s6 = ssub.s32 1, %s4
  %s7 = scalar_select 0, %s6, %s4
  $region1: #{prenorm_linear.1} parent=0
    #allocation2 [shape = 'u8[8192]{0}', space=vmem, size = 0x2000, scoped, tag = 'output window, operand 0, single buffered']
    #allocation3 [shape = 's32[1]{0}', space=sflag, size = 0x4, scoped, tag = 'scoped memory for prenorm_linear.1']
    %8 = vsyncpa [#allocation3], 0
    // Predicated region
    $region2: #{prenorm_linear.1} parent=1 // pred_check
      _
    $region3: #{prenorm_linear.1} parent=1 // pred_check_branch
      %10 = sbr.rel (0) target = $region5
    $region4: #{prenorm_linear.1} parent=1 // pred_region
      _
    $region5: #{prenorm_linear.1} parent=1 // pred_fallthru
      _
    // Predicated region
    $region6: #{prenorm_linear.1} parent=1 // pred_check
      _
    $region7: #{prenorm_linear.1} parent=1 // pred_check_branch
      %12 = sbr.rel (0) target = $region9
    $region8: #{prenorm_linear.1} parent=1 // pred_region
      _
    $region9: #{prenorm_linear.1} parent=1 // pred_fallthru
      _
    // Predicated region
    $region10: #{prenorm_linear.1} parent=1 // pred_check
      _
    $region11: #{prenorm_linear.1} parent=1 // pred_check_branch
      %14 = sbr.rel (0) target = $region13
    $region12: #{prenorm_linear.1} parent=1 // pred_region
      _
    $region13: #{prenorm_linear.1} parent=1 // pred_fallthru
      _
    %v15 = vld [vmem:[%s0] sm:$0xff]
    %v16 = vld [vmem:[%s0 + $0x8] sm:$0xff]
    %vm17 = vcmask 261120
    %v18 = vsel %vm17, %v15, 0.0
    %19 = vadd.xlane.f32.xlu0 %v18
    %v20 = vpop.xlane.xlu0 %19
    %v21 = vsel %vm17, %v16, 0.0
    %22 = vadd.xlane.f32.xlu0 %v21
    %v23 = vpop.xlane.xlu0 %22
    %v24 = vmul.f32 %v20, 0.03125
    %v25 = vmul.f32 %v23, 0.03125
    %v26 = vsub.f32 %v15, %v24
    %v27 = vsub.f32 %v16, %v25
    %v28 = vmul.f32 %v26, %v26
    %v29 = vmul.f32 %v27, %v27
    %v30 = vsel %vm17, %v28, 0.0
    %31 = vadd.xlane.f32.xlu0 %v30
    %v32 = vpop.xlane.xlu0 %31
    %v33 = vsel %vm17, %v29, 0.0
    %34 = vadd.xlane.f32.xlu0 %v33
    %v35 = vpop.xlane.xlu0 %34
    %v36 = vmul.f32 %v32, 0.03125
    %v37 = vmul.f32 %v35, 0.03125
    %v38 = vadd.f32 %v36, 1e-05
    %v39 = vadd.f32 %v37, 1e-05
    %v40 = vrsqrt.pop %v38
    %v41 = vrsqrt.pop %v39
    %v42 = vmul.f32 %v26, %v40
    %v43 = vmul.f32 %v27, %v41
    %v44 = vld [vmem:[%s1] sm:$0xff]
    %v45 = vld [vmem:[%s1 + $0x8] sm:$0xff]
    %v46 = vld [vmem:[%s1 + $0x10] sm:$0xff]
    %v47 = vld [vmem:[%s1 + $0x18] sm:$0xff]
    %v48 = vld [vmem:[%s2] sm:$0x1]
    %v50 = vlaneseq
    %v51 = vshrl.u32 %v50, 7
    %v52 = vsub.s32 0, %v51
    %v53 = vrot.slane %v48, %v52
    %v56 = vsel %vm17, %v42, 0
    %v59 = vsel %vm17, %v43, 0
    %61 = vmatprep.subr.mxu0 0.0
    %62 = vmatpush1.msra.mxu0 0.0
    %63 = vmatprep.subr.mxu0 0.0
    %64 = vmatpush1.msra.mxu0 0.0
    %65 = vmatprep.subr.mxu0 0.0
    %66 = vmatpush1.msra.mxu0 0.0
    %67 = vmatprep.subr.mxu0 0.0
    %68 = vmatpush1.msra.mxu0 0.0
    %69 = vmatprep.subr.mxu0 0.0
    %70 = vmatpush1.msra.mxu0 0.0
    %71 = vmatprep.subr.mxu0 0.0
    %72 = vmatpush1.msra.mxu0 0.0
    %73 = vmatprep.subr.mxu0 0.0
    %74 = vmatpush1.msra.mxu0 0.0
    %75 = vmatprep.subr.mxu0 0.0
    %76 = vmatpush1.msra.mxu0 0.0
    %77 = vmatprep.subr.mxu0 0.0
    %78 = vmatpush1.msra.mxu0 0.0
    %79 = vmatprep.subr.mxu0 0.0
    %80 = vmatpush1.msra.mxu0 0.0
    %81 = vmatprep.subr.mxu0 0.0
    %82 = vmatpush1.msra.mxu0 0.0
    %83 = vmatprep.subr.mxu0 0.0
    %84 = vmatpush1.msra.mxu0 0.0
    %85 = vmatprep.subr.mxu0 0.0
    %86 = vmatpush1.msra.mxu0 %v47
    %87 = vmatprep.subr.mxu0 0.0
    %88 = vmatpush1.msra.mxu0 %v46
    %89 = vmatprep.subr.mxu0 0.0
    %90 = vmatpush1.msra.mxu0 %v45
    %91 = vmatprep.subr.mxu0 0.0
    %92 = vmatpush1.msra.mxu0 %v44
    %93 = vmatprep.subr.mxu0 0.0
    %94 = vmatpush2.msra.mxu0 0.0
    %95 = vmatprep.subr.mxu0 0.0
    %96 = vmatpush2.msra.mxu0 0.0
    %97 = vmatprep.subr.mxu0 0.0
    %98 = vmatpush2.msra.mxu0 0.0
    %99 = vmatprep.subr.mxu0 0.0
    %100 = vmatpush2.msra.mxu0 0.0
    %101 = vmatprep.subr.mxu0 0.0
    %102 = vmatpush2.msra.mxu0 0.0
    %103 = vmatprep.subr.mxu0 0.0
    %104 = vmatpush2.msra.mxu0 0.0
    %105 = vmatprep.subr.mxu0 0.0
    %106 = vmatpush2.msra.mxu0 0.0
    %107 = vmatprep.subr.mxu0 0.0
    %108 = vmatpush2.msra.mxu0 0.0
    %109 = vmatprep.subr.mxu0 0.0
    %110 = vmatpush2.msra.mxu0 0.0
    %111 = vmatprep.subr.mxu0 0.0
    %112 = vmatpush2.msra.mxu0 0.0
    %113 = vmatprep.subr.mxu0 0.0
    %114 = vmatpush2.msra.mxu0 0.0
    %115 = vmatprep.subr.mxu0 0.0
    %116 = vmatpush2.msra.mxu0 0.0
    %117 = vmatprep.subr.mxu0 0.0
    %118 = vmatpush2.msra.mxu0 0.0
    %119 = vmatprep.subr.mxu0 0.0
    %120 = vmatpush2.msra.mxu0 0.0
    %121 = vmatprep.subr.mxu0 0.0
    %122 = vmatpush2.msra.mxu0 0.0
    %123 = vmatprep.subr.mxu0 0.0
    %124 = vmatpush2.msra.mxu0 0.0
    %125 = vmatprep.mubr.f32.mxu0 0.0
    %126 = vmatmul.mubr.f32.gmra.mxu0 %v56
    %v127 = vpop.f32.mrf.mxu0
    %v128 = vadd.f32 %v53, %v127
    %v129 = vpop.f32.mrf.mxu0
    %130 = vmatprep.mubr.f32.mxu0 0.0
    %131 = vmatmul.mubr.f32.gmra.mxu0 %v59
    %v132 = vpop.f32.mrf.mxu0
    %v133 = vadd.f32 %v53, %v132
    %v134 = vpop.f32.mrf.mxu0
    %135 = vdwg.mxu0
    %136 = vst.msk [vmem:[#allocation2] sm:$0xff] %vm17, %v128
    %137 = vst.msk [vmem:[#allocation2 + $0x8] sm:$0xff] %vm17, %v133
    // Predicated region
    $region14: #{prenorm_linear.1} parent=1 // pred_check
      _
    $region15: #{prenorm_linear.1} parent=1 // pred_check_branch
      %139 = sbr.rel (0) target = $region17
    $region16: #{prenorm_linear.1} parent=1 // pred_region
      %s141 = ssub.s32 256, 256
      %142 = vsyncadd [#allocation3], %s141
      %s143 = sshll.u32 [#allocation2], 4
      %s144 = int_to_ptr.vmem [resolvable:$true] %s143
      %149 = dma.vmem_to_hbm [thread:$0]  %s144, 256, %s3, [#allocation3], 128, 128, 8
    $region17: #{prenorm_linear.1} parent=1 // pred_fallthru
      _
    // Predicated region
    $region18: #{prenorm_linear.1} parent=1 // pred_check
      _
    $region19: #{prenorm_linear.1} parent=1 // pred_check_branch
      %151 = sbr.rel (0) target = $region21
    $region20: #{prenorm_linear.1} parent=1 // pred_region
      %152 = dma.done [#allocation3], 256
    $region21: #{prenorm_linear.1} parent=1 // pred_fallthru
      _
    %153 = vsyncpa [#allocation3], 1

// kernel: prenorm_linear.1
$region0: #{prenorm_linear.1}
  #allocation0 [shape = 'u32[]', space=smem, size = 0x4, offset = 0x4, fixed_abs, tag = 'smem constant byte address 0x4 - core index']
  #allocation1 [shape = 'u32[144,128]{1,0:T(1,128)}', space=vmem, size = 0x12000, scoped, tag = 'internal scratch']
  %s0 = inlined_call_operand.vmem [shape: f32[16,32], index: 0, kind: input, shape index: {}]
  %s1 = inlined_call_operand.vmem [shape: f32[32,32], index: 1, kind: input, shape index: {}]
  %s2 = inlined_call_operand.vmem [shape: f32[1,32], index: 2, kind: input, shape index: {}]
  %s3 = inlined_call_operand.hbm [shape: f32[16,32], index: 3, kind: output, shape index: {}]
  %s4 = sld [smem:[#allocation0]]
  $region22: #{prenorm_linear.1} parent=0
    _
  %s6 = ssub.s32 1, %s4
  %s7 = scalar_select 0, %s6, %s4
  $region1: #{prenorm_linear.1} parent=0
    #allocation2 [shape = 'u8[8192]{0}', space=vmem, size = 0x2000, scoped, tag = 'output window, operand 0, single buffered']
    #allocation3 [shape = 's32[1]{0}', space=sflag, size = 0x4, scoped, tag = 'scoped memory for prenorm_linear.1']
    %8 = vsyncpa [#allocation3], 0
    // Predicated region
    $region2: #{prenorm_linear.1} parent=1 // pred_check
      _
    $region3: #{prenorm_linear.1} parent=1 // pred_check_branch
      %10 = sbr.rel (0) target = $region5
    $region4: #{prenorm_linear.1} parent=1 // pred_region
      _
    $region5: #{prenorm_linear.1} parent=1 // pred_fallthru
      _
    // Predicated region
    $region6: #{prenorm_linear.1} parent=1 // pred_check
      _
    $region7: #{prenorm_linear.1} parent=1 // pred_check_branch
      %12 = sbr.rel (0) target = $region9
    $region8: #{prenorm_linear.1} parent=1 // pred_region
      _
    $region9: #{prenorm_linear.1} parent=1 // pred_fallthru
      _
    // Predicated region
    $region10: #{prenorm_linear.1} parent=1 // pred_check
      _
    $region11: #{prenorm_linear.1} parent=1 // pred_check_branch
      %14 = sbr.rel (0) target = $region13
    $region12: #{prenorm_linear.1} parent=1 // pred_region
      _
    $region13: #{prenorm_linear.1} parent=1 // pred_fallthru
      _
    %v15 = vld [vmem:[%s0] sm:$0xff]
    %v16 = vld [vmem:[%s0 + $0x8] sm:$0xff]
    %vm17 = vcmask 261120
    %v18 = vsel %vm17, %v15, 0.0
    %19 = vadd.xlane.f32.xlu0 %v18
    %v20 = vpop.xlane.xlu0 %19
    %v21 = vsel %vm17, %v16, 0.0
    %22 = vadd.xlane.f32.xlu0 %v21
    %v23 = vpop.xlane.xlu0 %22
    %v24 = vmul.f32 %v20, 0.03125
    %v25 = vmul.f32 %v23, 0.03125
    %v26 = vsub.f32 %v15, %v24
    %v27 = vsub.f32 %v16, %v25
    %v28 = vmul.f32 %v26, %v26
    %v29 = vmul.f32 %v27, %v27
    %v30 = vsel %vm17, %v28, 0.0
    %31 = vadd.xlane.f32.xlu0 %v30
    %v32 = vpop.xlane.xlu0 %31
    %v33 = vsel %vm17, %v29, 0.0
    %34 = vadd.xlane.f32.xlu0 %v33
    %v35 = vpop.xlane.xlu0 %34
    %v36 = vmul.f32 %v32, 0.03125
    %v37 = vmul.f32 %v35, 0.03125
    %v38 = vadd.f32 %v36, 1e-05
    %v39 = vadd.f32 %v37, 1e-05
    %v40 = vrsqrt.pop %v38
    %v41 = vrsqrt.pop %v39
    %v42 = vmul.f32 %v26, %v40
    %v43 = vmul.f32 %v27, %v41
    %v44 = vld [vmem:[%s1] sm:$0xff]
    %v45 = vld [vmem:[%s1 + $0x8] sm:$0xff]
    %v46 = vld [vmem:[%s1 + $0x10] sm:$0xff]
    %v47 = vld [vmem:[%s1 + $0x18] sm:$0xff]
    %v48 = vld [vmem:[%s2] sm:$0x1]
    %v50 = vlaneseq
    %v51 = vshrl.u32 %v50, 7
    %v52 = vsub.s32 0, %v51
    %v53 = vrot.slane %v48, %v52
    %v56 = vsel %vm17, %v42, 0
    %v59 = vsel %vm17, %v43, 0
    %61 = vmatprep.subr.mxu0 0.0
    %62 = vmatpush1.msra.mxu0 0.0
    %63 = vmatprep.subr.mxu0 0.0
    %64 = vmatpush1.msra.mxu0 0.0
    %65 = vmatprep.subr.mxu0 0.0
    %66 = vmatpush1.msra.mxu0 0.0
    %67 = vmatprep.subr.mxu0 0.0
    %68 = vmatpush1.msra.mxu0 0.0
    %69 = vmatprep.subr.mxu0 0.0
    %70 = vmatpush1.msra.mxu0 0.0
    %71 = vmatprep.subr.mxu0 0.0
    %72 = vmatpush1.msra.mxu0 0.0
    %73 = vmatprep.subr.mxu0 0.0
    %74 = vmatpush1.msra.mxu0 0.0
    %75 = vmatprep.subr.mxu0 0.0
    %76 = vmatpush1.msra.mxu0 0.0
    %77 = vmatprep.subr.mxu0 0.0
    %78 = vmatpush1.msra.mxu0 0.0
    %79 = vmatprep.subr.mxu0 0.0
    %80 = vmatpush1.msra.mxu0 0.0
    %81 = vmatprep.subr.mxu0 0.0
    %82 = vmatpush1.msra.mxu0 0.0
    %83 = vmatprep.subr.mxu0 0.0
    %84 = vmatpush1.msra.mxu0 0.0
    %85 = vmatprep.subr.mxu0 0.0
    %86 = vmatpush1.msra.mxu0 %v47
    %87 = vmatprep.subr.mxu0 0.0
    %88 = vmatpush1.msra.mxu0 %v46
    %89 = vmatprep.subr.mxu0 0.0
    %90 = vmatpush1.msra.mxu0 %v45
    %91 = vmatprep.subr.mxu0 0.0
    %92 = vmatpush1.msra.mxu0 %v44
    %93 = vmatprep.subr.mxu0 0.0
    %94 = vmatpush2.msra.mxu0 0.0
    %95 = vmatprep.subr.mxu0 0.0
    %96 = vmatpush2.msra.mxu0 0.0
    %97 = vmatprep.subr.mxu0 0.0
    %98 = vmatpush2.msra.mxu0 0.0
    %99 = vmatprep.subr.mxu0 0.0
    %100 = vmatpush2.msra.mxu0 0.0
    %101 = vmatprep.subr.mxu0 0.0
    %102 = vmatpush2.msra.mxu0 0.0
    %103 = vmatprep.subr.mxu0 0.0
    %104 = vmatpush2.msra.mxu0 0.0
    %105 = vmatprep.subr.mxu0 0.0
    %106 = vmatpush2.msra.mxu0 0.0
    %107 = vmatprep.subr.mxu0 0.0
    %108 = vmatpush2.msra.mxu0 0.0
    %109 = vmatprep.subr.mxu0 0.0
    %110 = vmatpush2.msra.mxu0 0.0
    %111 = vmatprep.subr.mxu0 0.0
    %112 = vmatpush2.msra.mxu0 0.0
    %113 = vmatprep.subr.mxu0 0.0
    %114 = vmatpush2.msra.mxu0 0.0
    %115 = vmatprep.subr.mxu0 0.0
    %116 = vmatpush2.msra.mxu0 0.0
    %117 = vmatprep.subr.mxu0 0.0
    %118 = vmatpush2.msra.mxu0 0.0
    %119 = vmatprep.subr.mxu0 0.0
    %120 = vmatpush2.msra.mxu0 0.0
    %121 = vmatprep.subr.mxu0 0.0
    %122 = vmatpush2.msra.mxu0 0.0
    %123 = vmatprep.subr.mxu0 0.0
    %124 = vmatpush2.msra.mxu0 0.0
    %125 = vmatprep.mubr.f32.mxu0 0.0
    %126 = vmatmul.mubr.f32.gmra.mxu0 %v56
    %v127 = vpop.f32.mrf.mxu0
    %v128 = vadd.f32 %v53, %v127
    %v129 = vpop.f32.mrf.mxu0
    %130 = vmatprep.mubr.f32.mxu0 0.0
    %131 = vmatmul.mubr.f32.gmra.mxu0 %v59
    %v132 = vpop.f32.mrf.mxu0
    %v133 = vadd.f32 %v53, %v132
    %v134 = vpop.f32.mrf.mxu0
    %135 = vdwg.mxu0
    %136 = vst.msk [vmem:[#allocation2] sm:$0xff] %vm17, %v128
    %137 = vst.msk [vmem:[#allocation2 + $0x8] sm:$0xff] %vm17, %v133
    // Predicated region
    $region14: #{prenorm_linear.1} parent=1 // pred_check
      _
    $region15: #{prenorm_linear.1} parent=1 // pred_check_branch
      %139 = sbr.rel (0) target = $region17
    $region16: #{prenorm_linear.1} parent=1 // pred_region
      %s141 = ssub.s32 256, 256
      %142 = vsyncadd [#allocation3], %s141
      %s143 = sshll.u32 [#allocation2], 4
      %s144 = int_to_ptr.vmem [resolvable:$true] %s143
      %149 = dma.vmem_to_hbm [thread:$0]  %s144, 256, %s3, [#allocation3], 128, 128, 8
    $region17: #{prenorm_linear.1} parent=1 // pred_fallthru
      _
    // Predicated region
    $region18: #{prenorm_linear.1} parent=1 // pred_check
      _
    $region19: #{prenorm_linear.1} parent=1 // pred_check_branch
      %151 = sbr.rel (0) target = $region21
    $region20: #{prenorm_linear.1} parent=1 // pred_region
      %152 = dma.done [#allocation3], 256
    $region21: #{prenorm_linear.1} parent=1 // pred_fallthru
      _
    %153 = vsyncpa [#allocation3], 1

</llo_original>
